<compile_context>
chip_gen: v5e
topology: v5e:2x2
jax: 0.10.0
libtpu: 0.0.40
codegen_flags: <defaults>
</compile_context>

<pallas_src>
from functools import lru_cache, partial

import numpy as np
import jax
import jax.numpy as jnp
from jax import lax
from jax.experimental import pallas as pl
from jax.experimental.pallas import tpu as pltpu

# ----------------------------- configuration -------------------------------------
D_MODEL = 32                      # raw embedding width (true contraction depth)
K_BIAFFINE = 128                  # biaffine projection width (left / right)
C_PAD = 128                       # lane-padded label-logit width (N_LABELS real)
W_COLS = 2 * K_BIAFFINE + C_PAD   # fused left|right|label weight columns = 384
MXU_TARGET_ROWS = 256             # fill the 256-row MXU (v6e/v7x); on v5e's 4x128
                                  # MXU this simply becomes two passes -- harmless.
LABELS = [
    "nucleus-satellite:Elaboration",
    "satellite-nucleus:Attribution",
    "nucleus-nucleus:Joint",
    "nucleus-satellite:Contrast",
]
N_LABELS = len(LABELS)
# parent-label conditioning vocabulary: index 0 == None (no parent label)
PARENT_LABEL_TO_ID = {None: 0}
for _i, _l in enumerate(LABELS):
    PARENT_LABEL_TO_ID[_l] = _i + 1


# ----------------------------- Pallas span-scoring kernel ------------------------
def span_score_kernel(nblk_ref, h_ref, w_ref, split_ref, hw_ref, *, s_blk, n_pad):
    """Score one block of s_blk segments (one grid step).

    nblk_ref : SMEM (1,)              number of REAL blocks (scalar prefetch)
    h_ref    : [s_blk*n_pad, 32]      boundary reps, s_blk segments row-packed (VMEM)
    w_ref    : [32, 384]              fused left|right|label projection       (VMEM)
    split_ref: [1, n_pad, s_blk*n_pad] split scores, segments lane-packed     (VMEM out)
    hw_ref   : [s_blk*n_pad, 128]     per-boundary label features H @ Wlab    (VMEM out)
                                      span (i,j) label logits = hw[j]-hw[i] (host side)
    """
    @pl.when(pl.program_id(0) < nblk_ref[0])          # skip all-padding blocks
    def _():
        h = h_ref[...]                                              # [R, 32]
        # single fused MXU pass: left|right|label projections in one [32, 384] weight
        fused = jnp.dot(h, w_ref[...],
                        preferred_element_type=jnp.float32)         # [R, 384]
        proj = jnp.tanh(fused[:, : 2 * K_BIAFFINE])                 # [R, 256]
        hw_ref[...] = fused[:, 2 * K_BIAFFINE:]                     # [R, 128]

        # per-segment biaffine split scores; constant split bias dropped (it cancels
        # in the argmax over split points).  Results are packed along the lane axis
        # so the HBM writeback of split_ref is lane-dense.
        for s in range(s_blk):                                      # static unroll
            r0 = s * n_pad
            left = proj[r0:r0 + n_pad, :K_BIAFFINE]                 # [n_pad, K]
            right = proj[r0:r0 + n_pad, K_BIAFFINE:]                # [n_pad, K]
            split_ref[0, :, r0:r0 + n_pad] = lax.dot_general(
                left, right,
                dimension_numbers=(((1,), (1,)), ((), ())),
                preferred_element_type=jnp.float32)                 # [n_pad, n_pad]


def _vmem_limit_bytes(n_pad, s_blk):
    """Raise the scoped VMEM limit above the working set for big buckets."""
    rows = s_blk * n_pad
    blk = 4 * (rows * D_MODEL            # H block
               + D_MODEL * W_COLS        # fused weight
               + rows * W_COLS           # fused matmul intermediate
               + n_pad * rows            # packed split block
               + rows * C_PAD)           # hw block
    need = 3 * blk                       # double-buffered blocks + slack
    # default scoped limit: 16 MiB (v5e) / 32 MiB (v6e, v7x); keep below v7x's
    # 64 MiB physical VMEM.
    return int(min(max(need, 32 * 1024 * 1024), 60 * 1024 * 1024))


@lru_cache(maxsize=None)
def _get_span_scorer(num_blocks, n_pad, s_blk):
    """Build (and cache) the gridded, jitted scorer for one padding bucket."""
    rows_blk = s_blk * n_pad
    kernel = partial(span_score_kernel, s_blk=s_blk, n_pad=n_pad)
    call = pl.pallas_call(
        kernel,
        out_shape=(
            jax.ShapeDtypeStruct((num_blocks, n_pad, rows_blk), jnp.float32),
            jax.ShapeDtypeStruct((num_blocks * rows_blk, C_PAD), jnp.float32),
        ),
        grid_spec=pltpu.PrefetchScalarGridSpec(
            num_scalar_prefetch=1,                     # real block count -> SMEM
            grid=(num_blocks,),
            in_specs=[
                pl.BlockSpec((rows_blk, D_MODEL), lambda b, nblk: (b, 0)),   # H
                pl.BlockSpec((D_MODEL, W_COLS), lambda b, nblk: (0, 0)),     # W fused
            ],
            out_specs=(
                pl.BlockSpec((1, n_pad, rows_blk), lambda b, nblk: (b, 0, 0)),  # split
                pl.BlockSpec((rows_blk, C_PAD), lambda b, nblk: (b, 0)),        # hw
            ),
        ),
        compiler_params=pltpu.CompilerParams(
            dimension_semantics=("parallel",),          # shards blocks across v7x TCs
            vmem_limit_bytes=_vmem_limit_bytes(n_pad, s_blk)),
    )

    def scorer(nblk, h, w):
        split, hw = call(nblk, h, w)
        # device-side slice: only the 4 real label columns ever cross PCIe
        return split, hw[:, :N_LABELS]

    return jax.jit(scorer)


def _bucket(n, minimum):
    """Smallest power of two >= n, clamped to `minimum` (compile-cache buckets)."""
    return max(minimum, 1 << max(0, int(n - 1).bit_length()))


# ----------------------------- minimal Tree + tree glue --------------------------
class Tree:
    """Minimal nltk.Tree stand-in (label + ordered children; leaves are ints)."""

    def __init__(self, label, children):
        self._label = label
        self.children = list(children)

    def label(self):
        return self._label

    def copy(self):
        return Tree(self._label,
                    [c.copy() if isinstance(c, Tree) else c for c in self.children])

    def height(self):
        return 1 + max((c.height() if isinstance(c, Tree) else 1)
                       for c in self.children)

    def leaves(self):
        out = []
        for c in self.children:
            if isinstance(c, Tree):
                out.extend(c.leaves())
            else:
                out.append(c)
        return out

    def __repr__(self):
        return "({} {})".format(self._label,
                                " ".join(repr(c) for c in self.children))


def _is_preterminal(node):
    return (isinstance(node, Tree) and node.label() == "text"
            and len(node.children) == 1 and not isinstance(node.children[0], Tree))


def get_leaf_labels(tree):
    """Label of each leaf's grandparent (relation above the preterminal)."""
    if tree.height() <= 2:
        return [None]
    labels = []

    def rec(node):
        for ch in node.children:
            if isinstance(ch, Tree):
                if _is_preterminal(ch):
                    labels.append(node.label())
                else:
                    rec(ch)

    rec(tree)
    return labels


def joint_tree(parent_tree, child_trees):
    """Splice child trees into the parent tree's preterminals, renumber leaves."""
    jt = parent_tree.copy()
    if _is_preterminal(jt):
        jt = Tree("D-ROOT", [jt])

    idx = [0]

    def substitute(node):
        for i, ch in enumerate(node.children):
            if isinstance(ch, Tree):
                if _is_preterminal(ch):
                    node.children[i] = child_trees[idx[0]].copy()
                    idx[0] += 1
                else:
                    substitute(ch)

    substitute(jt)
    if len(jt.children) == 1 and isinstance(jt.children[0], Tree):
        jt = jt.children[0]

    counter = [0]

    def renumber(node):
        for i, ch in enumerate(node.children):
            if isinstance(ch, Tree):
                renumber(ch)
            else:
                node.children[i] = counter[0]
                counter[0] += 1

    renumber(jt)
    return jt


# ----------------------------- batched span-based sub-parser ---------------------
def _decode_tree(split_np, hw_np, n_units):
    """Greedy top-down decode of one segment from kernel scores (numpy, host)."""
    # TODO(synk): top-down decoding is data-dependent recursion -> stays in Python.
    def build(i, j):
        if j - i == 1:
            return Tree("text", [i])
        # span (i, j) label logits = hw[j] - hw[i] (boundary-difference encoding)
        lab = LABELS[int(np.argmax(hw_np[j] - hw_np[i]))]
        best_k = max(range(i + 1, j),
                     key=lambda k: float(split_np[i, k] + split_np[k, j]))
        return Tree(lab, [build(i, best_k), build(best_k, j)])

    return build(0, n_units)


def parse_units_batch(unit_emb_list, params, parent_labels):
    """Parse every segment of one hierarchy level with ONE gridded kernel call."""
    assert len(unit_emb_list) == len(parent_labels)
    parent_emb = np.asarray(params["parent_emb"], np.float64)

    # host-side boundary encoding: prefix sums (f64 to avoid cancellation) of
    # parent-conditioned unit embeddings, cast to f32 for the kernel
    boundary_list = []
    for emb, plab in zip(unit_emb_list, parent_labels):
        pid = PARENT_LABEL_TO_ID.get(plab, 0)
        x = np.asarray(emb, np.float64) + parent_emb[pid][None, :]
        H = np.concatenate(
            [np.zeros((1, D_MODEL), np.float64), np.cumsum(x, axis=0)], axis=0)
        boundary_list.append(H.astype(np.float32))        # [n_units+1, D_MODEL]

    n_segs = len(boundary_list)
    max_n = max(h.shape[0] for h in boundary_list)
    n_pad = _bucket(max_n, 8)                   # sublane-aligned boundary bucket

    # batch segments per grid step: fill the MXU rows (>=256) and make the packed
    # split output block lane-dense (last dim s_blk * n_pad)
    s_blk = max(1, MXU_TARGET_ROWS // n_pad)
    s_blk = min(s_blk, _bucket(n_segs, 1))      # don't over-pad tiny levels
    rows_blk = s_blk * n_pad
    nblk_real = -(-n_segs // s_blk)             # ceil: real segment-blocks
    num_blocks = _bucket(nblk_real, 1)          # pow2 compile bucket; padded blocks
                                                # are skipped in-kernel via pl.when

    h_flat = np.zeros((num_blocks * rows_blk, D_MODEL), np.float32)
    for si, H in enumerate(boundary_list):
        blk, s_in = divmod(si, s_blk)
        r0 = blk * rows_blk + s_in * n_pad
        h_flat[r0:r0 + H.shape[0]] = H

    scorer = _get_span_scorer(num_blocks, n_pad, s_blk)
    nblk_arr = jnp.asarray([nblk_real], jnp.int32)
    split_dev, hw_dev = scorer(nblk_arr, jnp.asarray(h_flat), params["w_fused"])
    split_dev, hw_dev = jax.block_until_ready((split_dev, hw_dev))

    # single device->host pull for the whole level (hw already sliced on device)
    split_np = np.asarray(split_dev)            # [num_blocks, n_pad, rows_blk]
    hw_np = np.asarray(hw_dev)                  # [num_blocks*rows_blk, N_LABELS]

    trees = []
    for si, emb in enumerate(unit_emb_list):
        n_units = int(np.asarray(emb).shape[0])
        N = n_units + 1
        blk, s_in = divmod(si, s_blk)
        c0 = s_in * n_pad
        seg_split = split_np[blk, :N, c0:c0 + N]
        r0 = blk * rows_blk + s_in * n_pad
        seg_hw = hw_np[r0:r0 + N]
        trees.append(_decode_tree(seg_split, seg_hw, n_units))
    return trees


# ----------------------------- HierarchicalParser --------------------------------
class HierarchicalParserPallas:
    def __init__(self, parsers, hierarchical_type):
        assert hierarchical_type in ["d2e", "d2s2e", "d2p2s2e"]
        self.parsers = parsers                 # dict: level name -> params
        self.hierarchical_type = hierarchical_type

    @staticmethod
    def _segment_means(embs, sizes):
        out, off = [], 0
        for s in sizes:
            out.append(np.mean(embs[off:off + s], axis=0))
            off += s
        return np.stack(out, axis=0)

    @staticmethod
    def _segments(embs, sizes):
        out, off = [], 0
        for s in sizes:
            out.append(embs[off:off + s])
            off += s
        return out

    def forward(self, doc):
        edu_emb = np.asarray(doc["edu_emb"], np.float32)       # [n_edus, D_MODEL]
        edus_per_sent = doc["edus_per_sent"]
        sents_per_para = doc["sents_per_para"]

        sent_embs = self._segment_means(edu_emb, edus_per_sent)
        edu_groups = self._segments(edu_emb, edus_per_sent)

        if self.hierarchical_type == "d2e":
            d2e_tree = parse_units_batch([edu_emb], self.parsers["d2e"], [None])[0]

        elif self.hierarchical_type == "d2s2e":
            d2s_tree = parse_units_batch([sent_embs], self.parsers["d2s"], [None])[0]
            sent_labels = get_leaf_labels(d2s_tree)
            s2e_trees = parse_units_batch(edu_groups, self.parsers["s2e"],
                                          sent_labels)
            d2e_tree = joint_tree(d2s_tree, s2e_trees)

        elif self.hierarchical_type == "d2p2s2e":
            para_embs = self._segment_means(sent_embs, sents_per_para)
            sent_groups = self._segments(sent_embs, sents_per_para)
            d2p_tree = parse_units_batch([para_embs], self.parsers["d2p"], [None])[0]
            para_labels = get_leaf_labels(d2p_tree)
            p2s_trees = parse_units_batch(sent_groups, self.parsers["p2s"],
                                          para_labels)
            d2s_tree = joint_tree(d2p_tree, p2s_trees)
            sent_labels = get_leaf_labels(d2s_tree)
            s2e_trees = parse_units_batch(edu_groups, self.parsers["s2e"],
                                          sent_labels)
            d2e_tree = joint_tree(d2s_tree, s2e_trees)
        else:
            raise ValueError("Unknown hierarchical type")

        return {"tree": [d2e_tree]}


# ----------------------------- deterministic parameter init ----------------------
def init_parser_params(key):
    k1, k2 = jax.random.split(key, 2)
    return {
        # fused weight: columns [0:128] left proj, [128:256] right proj,
        # [256:384] label head (only the first N_LABELS label columns are read).
        "w_fused": 0.1 * jax.random.normal(k1, (D_MODEL, W_COLS), jnp.float32),
        "parent_emb": 0.1 * jax.random.normal(
            k2, (N_LABELS + 1, D_MODEL), jnp.float32),
        # NOTE: scalar split bias removed -- a constant added to every split score
        # cancels in the argmax over split points, so it never changes the tree.
    }


# ----------------------------- main ----------------------------------------------
if __name__ == "__main__":
    key = jax.random.PRNGKey(0)
    k_data, k_d2s, k_s2e, k_d2p, k_p2s, k_d2e = jax.random.split(key, 6)

    # small synthetic document: 12 EDUs, sentences of [4, 3, 5] EDUs, paras [2, 1]
    n_edus = 12
    doc = {
        "edu_emb": jax.random.normal(k_data, (n_edus, D_MODEL), jnp.float32),
        "edus_per_sent": [4, 3, 5],
        "sents_per_para": [2, 1],
    }

    parsers = {
        "d2s": init_parser_params(k_d2s),
        "s2e": init_parser_params(k_s2e),
        "d2p": init_parser_params(k_d2p),
        "p2s": init_parser_params(k_p2s),
        "d2e": init_parser_params(k_d2e),
    }

    # two-level hierarchy
    model = HierarchicalParserPallas(parsers, hierarchical_type="d2s2e")
    tree_d2s2e = model.forward(doc)["tree"][0]
    assert tree_d2s2e.leaves() == list(range(n_edus)), tree_d2s2e

    # three-level hierarchy (exercises d2p / p2s batched levels too)
    model3 = HierarchicalParserPallas(parsers, hierarchical_type="d2p2s2e")
    tree_d2p2s2e = model3.forward(doc)["tree"][0]
    assert tree_d2p2s2e.leaves() == list(range(n_edus)), tree_d2p2s2e

    # explicit single kernel invocation + block on its device outputs
    scorer = _get_span_scorer(1, 8, 2)                     # 1 block, n_pad=8, s_blk=2
    h_demo = np.zeros((2 * 8, D_MODEL), np.float32)
    h_demo[:5] = np.concatenate(
        [np.zeros((1, D_MODEL), np.float64),
         np.cumsum(np.asarray(doc["edu_emb"][:4], np.float64), axis=0)],
        axis=0).astype(np.float32)
    out = scorer(jnp.asarray([1], jnp.int32), jnp.asarray(h_demo),
                 parsers["d2e"]["w_fused"])
    jax.block_until_ready(out)

    print("KERNEL_OK")
</pallas_src>

<mosaic_0001>
module attributes {stable_mosaic.version = 11 : i64} {
  func.func @span_score_kernel(%arg0: i32, %arg1: memref<1xi32, #tpu.memory_space<smem>>, %arg2: memref<8x32xf32, #tpu.memory_space<vmem>>, %arg3: memref<32x384xf32, #tpu.memory_space<vmem>>, %arg4: memref<1x8x8xf32, #tpu.memory_space<vmem>>, %arg5: memref<8x128xf32, #tpu.memory_space<vmem>>) attributes {dimension_semantics = [#tpu.dimension_semantics<parallel>], iteration_bounds = array<i64: 1>, scalar_prefetch = 1 : i64, scratch_operands = 0 : i64, tpu.core_type = #tpu.core_type<tc>, window_params = [{transform_indices = @transform_0, window_bounds = array<i64: 8, 32>}, {pipeline_mode = #tpu.pipeline_mode<synchronous>, transform_indices = @transform_1, window_bounds = array<i64: 32, 384>}, {transform_indices = @transform_2, window_bounds = array<i64: 1, 8, 8>}, {transform_indices = @transform_3, window_bounds = array<i64: 8, 128>}]} {
    %c0 = arith.constant 0 : index
    %0 = memref.load %arg1[%c0] : memref<1xi32, #tpu.memory_space<smem>>
    %1 = arith.cmpi slt, %arg0, %0 : i32
    %2 = arith.extui %1 : i1 to i32
    %c0_i32 = arith.constant 0 : i32
    %3 = arith.cmpi ne, %2, %c0_i32 : i32
    scf.if %3 {
      %c0_0 = arith.constant 0 : index
      %c0_1 = arith.constant 0 : index
      %4 = vector.load %arg2[%c0_0, %c0_1] : memref<8x32xf32, #tpu.memory_space<vmem>>, vector<8x32xf32>
      %c0_2 = arith.constant 0 : index
      %c0_3 = arith.constant 0 : index
      %5 = vector.load %arg3[%c0_2, %c0_3] : memref<32x384xf32, #tpu.memory_space<vmem>>, vector<32x384xf32>
      %cst = arith.constant dense<0.000000e+00> : vector<8x384xf32>
      %6 = tpu.matmul %4, %5, %cst {dimension_numbers = #tpu.dot_dimension_numbers<[1], [0], [0], [1], [0, 0, 1, 1], [], []>} : vector<8x32xf32>, vector<32x384xf32>, vector<8x384xf32> -> vector<8x384xf32>
      %7 = vector.extract_strided_slice %6 {offsets = [0, 0], sizes = [8, 256], strides = [1, 1]} : vector<8x384xf32> to vector<8x256xf32>
      %8 = math.tanh %7 : vector<8x256xf32>
      %9 = vector.extract_strided_slice %6 {offsets = [0, 256], sizes = [8, 128], strides = [1, 1]} : vector<8x384xf32> to vector<8x128xf32>
      %c0_4 = arith.constant 0 : index
      %c0_5 = arith.constant 0 : index
      %10 = vector.load %arg5[%c0_4, %c0_5] : memref<8x128xf32, #tpu.memory_space<vmem>>, vector<8x128xf32>
      tpu.vector_store %arg5[%c0_4, %c0_5], %9 {strides = array<i32>} : memref<8x128xf32, #tpu.memory_space<vmem>>, vector<8x128xf32>,
      %11 = vector.extract_strided_slice %8 {offsets = [0, 0], sizes = [8, 128], strides = [1, 1]} : vector<8x256xf32> to vector<8x128xf32>
      %12 = vector.extract_strided_slice %8 {offsets = [0, 128], sizes = [8, 128], strides = [1, 1]} : vector<8x256xf32> to vector<8x128xf32>
      %cst_6 = arith.constant dense<0.000000e+00> : vector<8x8xf32>
      %13 = tpu.matmul %11, %12, %cst_6 {dimension_numbers = #tpu.dot_dimension_numbers<[1], [1], [0], [0], [0, 0, 1, 0], [], []>} : vector<8x128xf32>, vector<8x128xf32>, vector<8x8xf32> -> vector<8x8xf32>
      %c0_7 = arith.constant 0 : index
      %c0_8 = arith.constant 0 : index
      %c0_9 = arith.constant 0 : index
      %14 = vector.load %arg4[%c0_7, %c0_8, %c0_9] : memref<1x8x8xf32, #tpu.memory_space<vmem>>, vector<1x8x8xf32>
      %15 = vector.shape_cast %14 : vector<1x8x8xf32> to vector<8x8xf32>
      %16 = vector.shape_cast %13 : vector<8x8xf32> to vector<1x8x8xf32>
      tpu.vector_store %arg4[%c0_7, %c0_8, %c0_9], %16 {strides = array<i32>} : memref<1x8x8xf32, #tpu.memory_space<vmem>>, vector<1x8x8xf32>,
    } else {
    }
    return
  }
  func.func @transform_0(%arg0: i32, %arg1: memref<1xi32, #tpu.memory_space<smem>>) -> (i32, i32) {
    %c0_i32 = arith.constant 0 : i32
    %c0_i32_0 = arith.constant 0 : i32
    return %arg0, %c0_i32 : i32, i32
  }
  func.func @transform_1(%arg0: i32, %arg1: memref<1xi32, #tpu.memory_space<smem>>) -> (i32, i32) {
    %c0_i32 = arith.constant 0 : i32
    %c0_i32_0 = arith.constant 0 : i32
    %c0_i32_1 = arith.constant 0 : i32
    return %c0_i32, %c0_i32_0 : i32, i32
  }
  func.func @transform_2(%arg0: i32, %arg1: memref<1xi32, #tpu.memory_space<smem>>) -> (i32, i32, i32) {
    %c0_i32 = arith.constant 0 : i32
    %c0_i32_0 = arith.constant 0 : i32
    %c0_i32_1 = arith.constant 0 : i32
    return %arg0, %c0_i32, %c0_i32_0 : i32, i32, i32
  }
  func.func @transform_3(%arg0: i32, %arg1: memref<1xi32, #tpu.memory_space<smem>>) -> (i32, i32) {
    %c0_i32 = arith.constant 0 : i32
    %c0_i32_0 = arith.constant 0 : i32
    return %arg0, %c0_i32 : i32, i32
  }
}

</mosaic_0001>

<llo_original>
// kernel: scorer.1
$region0: #{scorer.1}
  #allocation0 [shape = 'u32[]', space=smem, size = 0x4, offset = 0x4, fixed_abs, tag = 'smem constant byte address 0x4 - core index']
  #allocation1 [shape = 'u32[72,128]{1,0:T(1,128)}', space=vmem, size = 0x9000, scoped, tag = 'internal scratch']
  #allocation2 [shape = 's32[1]{0}', space=sflag, size = 0x4, scoped, tag = 'scoped memory for scorer.1']
  #allocation3 [shape = 's32[1]{0:T(128)S(6)}', space=smem, size = 0x200, scoped, tag = 'prefetched SMEM operand 0']
  %s0 = inlined_call_operand.<no memory space> [shape: s32[1], index: 0, kind: input, shape index: {}]
  %s1 = inlined_call_operand.hbm [shape: f32[8,32], index: 1, kind: input, shape index: {}]
  %s2 = inlined_call_operand.hbm [shape: f32[32,384], index: 2, kind: input, shape index: {}]
  %s3 = inlined_call_operand.hbm [shape: f32[1,8,8], index: 3, kind: output, shape index: {0}]
  %s4 = inlined_call_operand.vmem [shape: f32[8,128], index: 4, kind: output, shape index: {1}]
  %5 = xla_tuple %s3, %s4
  %s6 = sld [smem:[#allocation0]]
  $region38: #{scorer.1} parent=0
    _
  %s8 = ssub.s32 1, %s6
  %s9 = scalar_select 0, %s8, %s6
  %10 = sst [smem:[#allocation3]] %s0
  $region1: #{scorer.1} parent=0
    #allocation4 [shape = 'u8[4096]{0}', space=vmem, size = 0x1000, scoped, tag = 'input window, operand 1, single buffered']
    #allocation5 [shape = 's32[1]{0}', space=sflag, size = 0x4, scoped, tag = 'scoped memory for scorer.1']
    #allocation6 [shape = 's32[1]{0}', space=sflag, size = 0x4, scoped, tag = 'scoped memory for scorer.1']
    #allocation7 [shape = 'u8[49152]{0}', space=vmem, size = 0xc000, scoped, tag = 'input window, operand 2, single buffered']
    #allocation8 [shape = 's32[1]{0}', space=sflag, size = 0x4, scoped, tag = 'scoped memory for scorer.1']
    #allocation9 [shape = 'u8[4096]{0}', space=vmem, size = 0x1000, scoped, tag = 'output window, operand 0, single buffered']
    %11 = vsyncpa [#allocation5], 0
    %12 = vsyncpa [#allocation8], 0
    %13 = vsyncpa [#allocation6], 0
    // Predicated region
    $region2: #{scorer.1} parent=1 // pred_check
      _
    $region3: #{scorer.1} parent=1 // pred_check_branch
      %15 = sbr.rel (0) target = $region5
    $region4: #{scorer.1} parent=1 // pred_region
      %17 = vsyncadd [#allocation5], 0
      %s19 = sshll.u32 %s1, 4
      %s20 = int_to_ptr.hbm [resolvable:$true] %s19
      %s21 = sshll.u32 [#allocation4], 4
      %s22 = int_to_ptr.vmem [resolvable:$true] %s21
      %24 = dma.hbm_to_vmem [thread:$0]  %s20, 128, %s22, [#allocation5]
    $region5: #{scorer.1} parent=1 // pred_fallthru
      _
    // Predicated region
    $region6: #{scorer.1} parent=1 // pred_check
      _
    $region7: #{scorer.1} parent=1 // pred_check_branch
      %26 = sbr.rel (0) target = $region9
    $region8: #{scorer.1} parent=1 // pred_region
      %28 = vsyncadd [#allocation8], 0
      %s29 = sshll.u32 %s2, 4
      %s30 = int_to_ptr.hbm [resolvable:$true] %s29
      %s31 = sshll.u32 [#allocation7], 4
      %s32 = int_to_ptr.vmem [resolvable:$true] %s31
      %37 = dma.hbm_to_vmem [thread:$0]  %s30, 1536, %s32, [#allocation8], 384, 384, 24
    $region9: #{scorer.1} parent=1 // pred_fallthru
      _
    // Predicated region
    $region10: #{scorer.1} parent=1 // pred_check
      _
    $region11: #{scorer.1} parent=1 // pred_check_branch
      %39 = sbr.rel (0) target = $region13
    $region12: #{scorer.1} parent=1 // pred_region
      %41 = dma.done [#allocation5], 128
    $region13: #{scorer.1} parent=1 // pred_fallthru
      _
    // Predicated region
    $region14: #{scorer.1} parent=1 // pred_check
      _
    $region15: #{scorer.1} parent=1 // pred_check_branch
      %43 = sbr.rel (0) target = $region17
    $region16: #{scorer.1} parent=1 // pred_region
      %45 = dma.done [#allocation8], 1536
    $region17: #{scorer.1} parent=1 // pred_fallthru
      _
    %s46 = sld [smem:[#allocation3]]
    %p47 = scmp.lt.s32.totalorder 0, %s46
    // Predicated region
    $region18: #{scorer.1} parent=1 // pred_check
      %p48 = pneg %p47
    $region19: #{scorer.1} parent=1 // pred_check_branch
      %50 = sbr.rel (%p48) target = $region21
    $region20: #{scorer.1} parent=1 // pred_region
      %v51 = vld [vmem:[#allocation4] sm:$0xff]
      %v52 = vld [vmem:[#allocation7] sm:$0xff]
      %v53 = vld [vmem:[#allocation7 + $0x8] sm:$0xff]
      %v54 = vld [vmem:[#allocation7 + $0x10] sm:$0xff]
      %v55 = vld [vmem:[#allocation7 + $0x18] sm:$0xff]
      %v56 = vld [vmem:[#allocation7 + $0x20] sm:$0xff]
      %v57 = vld [vmem:[#allocation7 + $0x28] sm:$0xff]
      %v58 = vld [vmem:[#allocation7 + $0x30] sm:$0xff]
      %v59 = vld [vmem:[#allocation7 + $0x38] sm:$0xff]
      %v60 = vld [vmem:[#allocation7 + $0x40] sm:$0xff]
      %v61 = vld [vmem:[#allocation7 + $0x48] sm:$0xff]
      %v62 = vld [vmem:[#allocation7 + $0x50] sm:$0xff]
      %v63 = vld [vmem:[#allocation7 + $0x58] sm:$0xff]
      %vm64 = vcmask 261120
      %v66 = vsel %vm64, %v51, 0
      %68 = vmatpush.msra.mxu0 0.0
      %69 = vmatpush.msra.mxu0 0.0
      %70 = vmatpush.msra.mxu0 0.0
      %71 = vmatpush.msra.mxu0 0.0
      %72 = vmatpush.msra.mxu0 0.0
      %73 = vmatpush.msra.mxu0 0.0
      %74 = vmatpush.msra.mxu0 0.0
      %75 = vmatpush.msra.mxu0 0.0
      %76 = vmatpush.msra.mxu0 0.0
      %77 = vmatpush.msra.mxu0 0.0
      %78 = vmatpush.msra.mxu0 0.0
      %79 = vmatpush.msra.mxu0 0.0
      %80 = vmatpush.msra.mxu0 %v61
      %81 = vmatpush.msra.mxu0 %v58
      %82 = vmatpush.msra.mxu0 %v55
      %83 = vmatpush.msra.mxu0 %v52
      %84 = vmatmul.f32.gmra.mxu0 %v66
      %v85 = vpop.f32.mrf.mxu0
      %v86 = vadd.f32 0.0, %v85
      %87 = vdwg.mxu0
      %88 = vmatpush.msra.mxu0 0.0
      %89 = vmatpush.msra.mxu0 0.0
      %90 = vmatpush.msra.mxu0 0.0
      %91 = vmatpush.msra.mxu0 0.0
      %92 = vmatpush.msra.mxu0 0.0
      %93 = vmatpush.msra.mxu0 0.0
      %94 = vmatpush.msra.mxu0 0.0
      %95 = vmatpush.msra.mxu0 0.0
      %96 = vmatpush.msra.mxu0 0.0
      %97 = vmatpush.msra.mxu0 0.0
      %98 = vmatpush.msra.mxu0 0.0
      %99 = vmatpush.msra.mxu0 0.0
      %100 = vmatpush.msra.mxu0 %v62
      %101 = vmatpush.msra.mxu0 %v59
      %102 = vmatpush.msra.mxu0 %v56
      %103 = vmatpush.msra.mxu0 %v53
      %104 = vmatmul.f32.gmra.mxu0 %v66
      %v105 = vpop.f32.mrf.mxu0
      %v106 = vadd.f32 0.0, %v105
      %107 = vdwg.mxu0
      %108 = vmatpush.msra.mxu0 0.0
      %109 = vmatpush.msra.mxu0 0.0
      %110 = vmatpush.msra.mxu0 0.0
      %111 = vmatpush.msra.mxu0 0.0
      %112 = vmatpush.msra.mxu0 0.0
      %113 = vmatpush.msra.mxu0 0.0
      %114 = vmatpush.msra.mxu0 0.0
      %115 = vmatpush.msra.mxu0 0.0
      %116 = vmatpush.msra.mxu0 0.0
      %117 = vmatpush.msra.mxu0 0.0
      %118 = vmatpush.msra.mxu0 0.0
      %119 = vmatpush.msra.mxu0 0.0
      %120 = vmatpush.msra.mxu0 %v63
      %121 = vmatpush.msra.mxu0 %v60
      %122 = vmatpush.msra.mxu0 %v57
      %123 = vmatpush.msra.mxu0 %v54
      %124 = vmatmul.f32.gmra.mxu0 %v66
      %v125 = vpop.f32.mrf.mxu0
      %v126 = vadd.f32 0.0, %v125
      %127 = vdwg.mxu0
      %v128 = vtanh.pop %v86
      %v129 = vtanh.pop %v106
      %130 = vst [vmem:[%s4] sm:$0xff] %v126
      %131 = vmatpush.xpose.msra.mxu0 0.0
      %132 = vmatpush.xpose.msra.mxu0 0.0
      %133 = vmatpush.xpose.msra.mxu0 0.0
      %134 = vmatpush.xpose.msra.mxu0 0.0
      %135 = vmatpush.xpose.msra.mxu0 0.0
      %136 = vmatpush.xpose.msra.mxu0 0.0
      %137 = vmatpush.xpose.msra.mxu0 0.0
      %138 = vmatpush.xpose.msra.mxu0 0.0
      %139 = vmatpush.xpose.msra.mxu0 0.0
      %140 = vmatpush.xpose.msra.mxu0 0.0
      %141 = vmatpush.xpose.msra.mxu0 0.0
      %142 = vmatpush.xpose.msra.mxu0 0.0
      %143 = vmatpush.xpose.msra.mxu0 0.0
      %144 = vmatpush.xpose.msra.mxu0 0.0
      %145 = vmatpush.xpose.msra.mxu0 0.0
      %146 = vmatpush.xpose.msra.mxu0 %v129
      %147 = vmatmul.f32.gmra.mxu0 %v128
      %v148 = vpop.f32.mrf.mxu0
      %v149 = vadd.f32 0.0, %v148
      %150 = vdwg.mxu0
      %vm151 = vcmask 64512
      %152 = vst.msk [vmem:[#allocation9] sm:$0xff] %vm151, %v149
    $region21: #{scorer.1} parent=1 // pred_fallthru
      _
    // Predicated region
    $region22: #{scorer.1} parent=1 // pred_check
      _
    $region23: #{scorer.1} parent=1 // pred_check_branch
      %154 = sbr.rel (0) target = $region25
    $region24: #{scorer.1} parent=1 // pred_region
      %156 = vsyncadd [#allocation6], 0
      %s158 = sshll.u32 [#allocation9], 4
      %s159 = int_to_ptr.vmem [resolvable:$true] %s158
      %s160 = sshll.u32 %s3, 4
      %s161 = int_to_ptr.hbm [resolvable:$true] %s160
      %163 = dma.vmem_to_hbm [thread:$0]  %s159, 128, %s161, [#allocation6]
    $region25: #{scorer.1} parent=1 // pred_fallthru
      _
    // Predicated region
    $region26: #{scorer.1} parent=1 // pred_check
      _
    $region27: #{scorer.1} parent=1 // pred_check_branch
      %165 = sbr.rel (0) target = $region29
    $region28: #{scorer.1} parent=1 // pred_region
      _
    $region29: #{scorer.1} parent=1 // pred_fallthru
      _
    // Predicated region
    $region30: #{scorer.1} parent=1 // pred_check
      _
    $region31: #{scorer.1} parent=1 // pred_check_branch
      %167 = sbr.rel (0) target = $region33
    $region32: #{scorer.1} parent=1 // pred_region
      %169 = dma.done [#allocation6], 128
    $region33: #{scorer.1} parent=1 // pred_fallthru
      _
    // Predicated region
    $region34: #{scorer.1} parent=1 // pred_check
      _
    $region35: #{scorer.1} parent=1 // pred_check_branch
      %171 = sbr.rel (0) target = $region37
    $region36: #{scorer.1} parent=1 // pred_region
      _
    $region37: #{scorer.1} parent=1 // pred_fallthru
      _
    %172 = vsyncpa [#allocation5], 1
    %173 = vsyncpa [#allocation8], 1
    %174 = vsyncpa [#allocation6], 1

</llo_original>
